<compile_context>
chip_gen: v6e
topology: v6e:2x2x1
jax: 0.10.0
libtpu: 0.0.40
codegen_flags: <defaults>
</compile_context>

<pallas_src>
import functools
import math

import jax
import jax.numpy as jnp
from jax import lax
from jax.experimental import pallas as pl
from jax.experimental.pallas import tpu as pltpu


# ---------------------------------------------------------------------------
# Small helpers
# ---------------------------------------------------------------------------

def _gelu_exact(x):
    # PyTorch nn.GELU default: exact erf formulation.
    # TODO(synk): if profiling shows the VPU erf polynomial is the binding slot,
    # switch to the tanh approximation (EUP slot) at a small deviation from torch.
    return 0.5 * x * (1.0 + lax.erf(x * (1.0 / math.sqrt(2.0))))


def _round_up(x, n):
    return (x + n - 1) // n * n


def _cdiv(a, b):
    return -(-a // b)


def _sublane_multiple(dtype):
    # Rows per packed sublane group: 8 for f32, 16 for bf16, 32 for int8/fp8.
    return max(8, 32 // max(1, jnp.dtype(dtype).itemsize))


@functools.lru_cache(maxsize=None)
def _chip_info():
    """Returns (vmem_capacity_bytes, feature_alignment, dual_tensorcore)."""
    kind = ""
    try:
        kind = jax.devices()[0].device_kind.lower()
    except Exception:
        pass

    vmem_cap = None
    try:
        vmem_cap = int(pltpu.get_tpu_info().vmem_capacity_bytes)
    except Exception:
        vmem_cap = None

    old_gen = any(t in kind for t in ("v2", "v3", "v4", "v5"))
    dual_core = ("v7" in kind) or ("7x" in kind)

    if vmem_cap is None or vmem_cap <= 0:
        if any(t in kind for t in ("v2", "v3")):
            vmem_cap = 16 * 1024 * 1024
        elif old_gen or "v6" in kind:
            vmem_cap = 128 * 1024 * 1024
        else:
            vmem_cap = 64 * 1024 * 1024       # conservative (v7x per-TC)
    if dual_core:                              # 64 MiB per TensorCore on v7x
        vmem_cap = min(vmem_cap, 64 * 1024 * 1024)

    feat_align = 128 if old_gen else 256       # 256x256 MXU on v6e / v7x
    return vmem_cap, feat_align, dual_core


@functools.lru_cache(maxsize=None)
def _buffered_supported():
    """Probe once whether pipeline_mode=pl.Buffered(1) compiles+runs here."""
    if not hasattr(pl, "Buffered"):
        return False
    try:
        spec = pl.BlockSpec((8, 128), lambda i: (0, 0),
                            pipeline_mode=pl.Buffered(1))
    except TypeError:
        return False
    try:
        def _probe(x_ref, o_ref):
            o_ref[...] = x_ref[...] + 1.0

        out = pl.pallas_call(
            _probe,
            out_shape=jax.ShapeDtypeStruct((8, 128), jnp.float32),
            grid=(2,),
            in_specs=[spec],
            out_specs=pl.BlockSpec((8, 128), lambda i: (0, 0)),
        )(jnp.zeros((8, 128), jnp.float32))
        jax.block_until_ready(out)
        return True
    except Exception:
        return False


def _spec(shape, index_map, single_buffered):
    # Single-buffer blocks whose block index never changes over the grid.
    if single_buffered:
        return pl.BlockSpec(shape, index_map, pipeline_mode=pl.Buffered(1))
    return pl.BlockSpec(shape, index_map)


# ---------------------------------------------------------------------------
# Tiling selection
# ---------------------------------------------------------------------------

def _choose_m_tiling(m, sublane, cap, dual_core):
    """(tile_m, n_tiles): sublane-aligned tile_m <= ~cap, minimal padding,
    and >= 2 (even-count) tiles on dual-TensorCore chips when m allows it."""
    cap = max(cap, sublane)
    want_split = dual_core and m >= 2 * sublane
    if m <= cap and not want_split:
        return m, 1                      # single full-extent tile: no padding needed
    m_aligned = _round_up(m, sublane)
    n = max(1, _cdiv(m_aligned, cap))
    if want_split:
        if n == 1:
            n = 2
        elif n % 2:
            n += 1                       # even tile count -> balanced 2-core split
    tile_m = _round_up(_cdiv(m_aligned, n), sublane)
    n = _cdiv(m_aligned, tile_m)
    return tile_m, n


def _select_tiling(m, d_in, h_p, d_out, x_item, w_item, b_item, out_item,
                   budget, sublane, feat_align, dual_core, w_bufs):
    """Pick (tile_m, n_m, tile_h, n_h).  Preference order:
       1) J == 1 (weights VMEM-resident) with tile_m up to ~512,
       2) J == 1 with tile_m shrunk to 384 / 256,
       3) tile the hidden dim (feat_align-aligned divisors of h_p, largest first),
       4) shrink tile_m further as a last resort."""
    d_in_e = _round_up(d_in, 128)        # lane-padded VMEM footprint estimates
    d_out_e = _round_up(d_out, 128)

    def vmem_bytes(tm, th, n_h):
        wb = w_bufs if n_h == 1 else 2   # weight blocks change per step iff n_h > 1
        return (2 * tm * d_in_e * x_item                      # x (double-buffered over M)
                + wb * (d_in_e * th + th * d_out_e) * w_item  # W1 + W2 blocks
                + wb * th * b_item + w_bufs * d_out_e * b_item
                + 2 * tm * d_out_e * out_item                 # output (double-buffered)
                + tm * th * 4                                 # f32 hidden intermediate
                + tm * d_out_e * 4)                           # f32 fc2 result / accumulator

    def fits(tm, th, n_h):
        return vmem_bytes(tm, th, n_h) <= budget

    # Stage 1/2: full hidden dim resident; shrink tile_m before touching H.
    for cap in (512, 384, 256):
        tm, nm = _choose_m_tiling(m, sublane, cap, dual_core)
        if fits(tm, h_p, 1):
            return tm, nm, h_p, 1

    # Stage 3: tile the hidden dim (largest MXU-aligned divisor of h_p that fits).
    h_divs = [t for t in range(feat_align, h_p + 1, feat_align) if h_p % t == 0]
    h_divs.sort(reverse=True)
    for cap in (256, 128, 64, 32, 16, 8):
        if cap < sublane:
            continue
        tm, nm = _choose_m_tiling(m, sublane, cap, dual_core)
        for th in h_divs:
            n_h = h_p // th
            if fits(tm, th, n_h):
                return tm, nm, th, n_h

    # Last resort: smallest tiles; may exceed the budget but lets Mosaic try.
    tm, nm = _choose_m_tiling(m, sublane, sublane, dual_core)
    return tm, nm, feat_align, h_p // feat_align


# ---------------------------------------------------------------------------
# Kernels
# ---------------------------------------------------------------------------

def _mlp_kernel_resident(x_ref, w1_ref, b1_ref, w2_ref, b2_ref, o_ref):
    # Full hidden dim resident (J == 1): fc1 -> GELU -> fc2 -> GELU in one pass.
    h = jnp.dot(x_ref[...], w1_ref[...], preferred_element_type=jnp.float32)
    h = _gelu_exact(h + b1_ref[...].astype(jnp.float32))
    # Dropout(p=0.0) is the identity in the reference module.
    y = jnp.dot(h.astype(w2_ref.dtype), w2_ref[...],
                preferred_element_type=jnp.float32)
    o_ref[...] = _gelu_exact(y + b2_ref[...].astype(jnp.float32)).astype(o_ref.dtype)


def _mlp_kernel_hidden_tiled(x_ref, w1_ref, b1_ref, w2_ref, b2_ref, o_ref, acc_ref):
    # Hidden dim tiled over grid axis 1 with an f32 VMEM accumulator.
    j = pl.program_id(1)

    @pl.when(j == 0)
    def _():
        acc_ref[...] = jnp.zeros_like(acc_ref)

    h = jnp.dot(x_ref[...], w1_ref[...], preferred_element_type=jnp.float32)
    h = _gelu_exact(h + b1_ref[...].astype(jnp.float32))
    # Single-statement accumulate (maps onto v7x's in-place MXU result buffer).
    acc_ref[...] += jnp.dot(h.astype(w2_ref.dtype), w2_ref[...],
                            preferred_element_type=jnp.float32)

    @pl.when(j == pl.num_programs(1) - 1)
    def _():
        o_ref[...] = _gelu_exact(
            acc_ref[...] + b2_ref[...].astype(jnp.float32)).astype(o_ref.dtype)


# ---------------------------------------------------------------------------
# Wrapper
# ---------------------------------------------------------------------------

def prepare_mlp_params(w1, b1, w2, b2):
    """One-time prep (outside jit): transpose PyTorch-layout (out, in) weights to
    (in, out) and zero-pad ONLY the hidden dim to the chip's MXU alignment.
    D_in / D_out stay unpadded (full-extent blocks in-kernel)."""
    hidden, d_in = w1.shape
    d_out, hidden2 = w2.shape
    assert hidden2 == hidden
    _, feat_align, _ = _chip_info()
    h_p = _round_up(hidden, feat_align)
    w1t = jnp.zeros((d_in, h_p), dtype=w1.dtype).at[:, :hidden].set(w1.T)
    b1r = jnp.zeros((1, h_p), dtype=b1.dtype).at[0, :hidden].set(b1)
    w2t = jnp.zeros((h_p, d_out), dtype=w2.dtype).at[:hidden, :].set(w2.T)
    b2r = b2.reshape(1, d_out)
    return w1t, b1r, w2t, b2r


def mlp_pallas(x, w1t, b1r, w2t, b2r):
    # Probe Buffered(1) support outside jit, pass as a static flag.
    return _mlp_pallas_jit(x, w1t, b1r, w2t, b2r,
                           use_buffered=_buffered_supported())


@functools.partial(jax.jit, static_argnames=("use_buffered",))
def _mlp_pallas_jit(x, w1t, b1r, w2t, b2r, *, use_buffered):
    d_in = x.shape[-1]
    d_in_w, h_p = w1t.shape
    h_p2, d_out = w2t.shape
    assert d_in_w == d_in and h_p2 == h_p

    lead_shape = x.shape[:-1]
    m = 1
    for s in lead_shape:
        m *= s
    x2 = x.reshape(m, d_in)

    vmem_cap, feat_align, dual_core = _chip_info()
    vmem_limit = int(vmem_cap * 0.85)     # ~108 MiB v5e/v6e, ~54 MiB v7x per TC
    budget = int(vmem_limit * 0.80)       # headroom for compiler-internal scratch
    sublane = _sublane_multiple(x.dtype)
    w_bufs = 1 if use_buffered else 2

    x_item = jnp.dtype(x.dtype).itemsize
    w_item = jnp.dtype(w1t.dtype).itemsize
    b_item = jnp.dtype(b1r.dtype).itemsize
    out_item = x_item

    tile_m, n_m, tile_h, n_h = _select_tiling(
        m, d_in, h_p, d_out, x_item, w_item, b_item, out_item,
        budget, sublane, feat_align, dual_core, w_bufs)

    m_p = tile_m * n_m
    if m_p != m:
        # Ragged last token tile: zero-pad rows (sliced off below).
        # TODO(synk): mask the ragged last M tile in-kernel to drop this pad/slice.
        x2 = jnp.pad(x2, ((0, m_p - m), (0, 0)))

    compiler_params = pltpu.CompilerParams(
        dimension_semantics=("parallel",) if n_h == 1 else ("parallel", "arbitrary"),
        vmem_limit_bytes=vmem_limit,
    )

    if n_h == 1:
        # Weights/biases have constant block indices -> resident, single-buffered.
        grid_spec = pltpu.PrefetchScalarGridSpec(
            num_scalar_prefetch=0,
            grid=(n_m,),
            in_specs=[
                pl.BlockSpec((tile_m, d_in), lambda i: (i, 0)),
                _spec((d_in, h_p), lambda i: (0, 0), use_buffered),
                _spec((1, h_p), lambda i: (0, 0), use_buffered),
                _spec((h_p, d_out), lambda i: (0, 0), use_buffered),
                _spec((1, d_out), lambda i: (0, 0), use_buffered),
            ],
            out_specs=pl.BlockSpec((tile_m, d_out), lambda i: (i, 0)),
        )
        kernel = _mlp_kernel_resident
    else:
        grid_spec = pltpu.PrefetchScalarGridSpec(
            num_scalar_prefetch=0,
            grid=(n_m, n_h),
            in_specs=[
                pl.BlockSpec((tile_m, d_in), lambda i, j: (i, 0)),
                pl.BlockSpec((d_in, tile_h), lambda i, j: (0, j)),
                pl.BlockSpec((1, tile_h), lambda i, j: (0, j)),
                pl.BlockSpec((tile_h, d_out), lambda i, j: (j, 0)),
                _spec((1, d_out), lambda i, j: (0, 0), use_buffered),
            ],
            out_specs=pl.BlockSpec((tile_m, d_out), lambda i, j: (i, 0)),
            scratch_shapes=[pltpu.VMEM((tile_m, d_out), jnp.float32)],
        )
        kernel = _mlp_kernel_hidden_tiled

    out = pl.pallas_call(
        kernel,
        out_shape=jax.ShapeDtypeStruct((m_p, d_out), x.dtype),
        grid_spec=grid_spec,
        compiler_params=compiler_params,
    )(x2, w1t, b1r, w2t, b2r)

    if m_p != m:
        out = out[:m]
    return out.reshape(*lead_shape, d_out)


def mlp_reference(x, w1, b1, w2, b2):
    # Matches the PyTorch forward: fc1 -> GELU -> (dropout p=0) -> fc2 -> GELU.
    h = _gelu_exact(jnp.einsum("...i,hi->...h", x, w1) + b1)
    return _gelu_exact(jnp.einsum("...h,oh->...o", h, w2) + b2)


if __name__ == "__main__":
    # Small shapes consistent with the module's forward:
    #   batch=2, seq=8, in_features=16, hidden_features=32, out_features=16
    B, S, D_IN, HIDDEN, D_OUT = 2, 8, 16, 32, 16

    key = jax.random.PRNGKey(0)
    kx, k1, kb1, k2, kb2 = jax.random.split(key, 5)

    x = jax.random.normal(kx, (B, S, D_IN), dtype=jnp.float32)

    # Deterministic synthetic init (PyTorch Linear weight layout (out, in)).
    lim1 = 1.0 / math.sqrt(D_IN)
    w1 = jax.random.uniform(k1, (HIDDEN, D_IN), minval=-lim1, maxval=lim1,
                            dtype=jnp.float32)
    b1 = jax.random.uniform(kb1, (HIDDEN,), minval=-lim1, maxval=lim1,
                            dtype=jnp.float32)
    lim2 = 1.0 / math.sqrt(HIDDEN)
    w2 = jax.random.uniform(k2, (D_OUT, HIDDEN), minval=-lim2, maxval=lim2,
                            dtype=jnp.float32)
    b2 = jax.random.uniform(kb2, (D_OUT,), minval=-lim2, maxval=lim2,
                            dtype=jnp.float32)

    # One-time parameter prep (transpose + hidden-dim pad) outside the jitted forward.
    w1t, b1r, w2t, b2r = prepare_mlp_params(w1, b1, w2, b2)

    out = mlp_pallas(x, w1t, b1r, w2t, b2r)
    out = jax.block_until_ready(out)

    ref = mlp_reference(x, w1, b1, w2, b2)
    assert out.shape == (B, S, D_OUT), out.shape
    max_err = float(jnp.max(jnp.abs(out - ref)))
    assert jnp.allclose(out, ref, atol=1e-5, rtol=1e-5), max_err

    print("KERNEL_OK")
</pallas_src>

<mosaic_0001>
module attributes {stable_mosaic.version = 11 : i64} {
  func.func @_probe(%arg0: i32, %arg1: memref<8x128xf32, #tpu.memory_space<vmem>>, %arg2: memref<8x128xf32, #tpu.memory_space<vmem>>) attributes {dimension_semantics = [#tpu.dimension_semantics<arbitrary>], iteration_bounds = array<i64: 2>, scalar_prefetch = 0 : i64, scratch_operands = 0 : i64, tpu.core_type = #tpu.core_type<tc>, window_params = [{pipeline_mode = #tpu.pipeline_mode<synchronous>, transform_indices = @transform_0, window_bounds = array<i64: 8, 128>}, {pipeline_mode = #tpu.pipeline_mode<synchronous>, transform_indices = @transform_1, window_bounds = array<i64: 8, 128>}]} {
    %c0 = arith.constant 0 : index
    %c0_0 = arith.constant 0 : index
    %0 = vector.load %arg1[%c0, %c0_0] : memref<8x128xf32, #tpu.memory_space<vmem>>, vector<8x128xf32>
    %cst = arith.constant 1.000000e+00 : f32
    %1 = vector.broadcast %cst : f32 to vector<8x128xf32>
    %2 = arith.addf %0, %1 : vector<8x128xf32>
    %c0_1 = arith.constant 0 : index
    %c0_2 = arith.constant 0 : index
    %3 = vector.load %arg2[%c0_1, %c0_2] : memref<8x128xf32, #tpu.memory_space<vmem>>, vector<8x128xf32>
    tpu.vector_store %arg2[%c0_1, %c0_2], %2 {strides = array<i32>} : memref<8x128xf32, #tpu.memory_space<vmem>>, vector<8x128xf32>,
    return
  }
  func.func @transform_0(%arg0: i32) -> (i32, i32) {
    %c0_i32 = arith.constant 0 : i32
    %c0_i32_0 = arith.constant 0 : i32
    %c0_i32_1 = arith.constant 0 : i32
    return %c0_i32, %c0_i32_0 : i32, i32
  }
  func.func @transform_1(%arg0: i32) -> (i32, i32) {
    %c0_i32 = arith.constant 0 : i32
    %c0_i32_0 = arith.constant 0 : i32
    %c0_i32_1 = arith.constant 0 : i32
    return %c0_i32, %c0_i32_0 : i32, i32
  }
}

module attributes {stable_mosaic.version = 11 : i64} {
  func.func @_mlp_kernel_resident(%arg0: i32, %arg1: memref<16x16xf32, #tpu.memory_space<vmem>>, %arg2: memref<16x256xf32, #tpu.memory_space<vmem>>, %arg3: memref<1x256xf32, #tpu.memory_space<vmem>>, %arg4: memref<256x16xf32, #tpu.memory_space<vmem>>, %arg5: memref<1x16xf32, #tpu.memory_space<vmem>>, %arg6: memref<16x16xf32, #tpu.memory_space<vmem>>) attributes {dimension_semantics = [#tpu.dimension_semantics<parallel>], iteration_bounds = array<i64: 1>, scalar_prefetch = 0 : i64, scratch_operands = 0 : i64, tpu.core_type = #tpu.core_type<tc>, window_params = [{transform_indices = @transform_0, window_bounds = array<i64: 16, 16>}, {pipeline_mode = #tpu.pipeline_mode<synchronous>, transform_indices = @transform_1, window_bounds = array<i64: 16, 256>}, {pipeline_mode = #tpu.pipeline_mode<synchronous>, transform_indices = @transform_2, window_bounds = array<i64: 1, 256>}, {pipeline_mode = #tpu.pipeline_mode<synchronous>, transform_indices = @transform_3, window_bounds = array<i64: 256, 16>}, {pipeline_mode = #tpu.pipeline_mode<synchronous>, transform_indices = @transform_4, window_bounds = array<i64: 1, 16>}, {transform_indices = @transform_5, window_bounds = array<i64: 16, 16>}]} {
    %c0 = arith.constant 0 : index
    %c0_0 = arith.constant 0 : index
    %0 = vector.load %arg1[%c0, %c0_0] : memref<16x16xf32, #tpu.memory_space<vmem>>, vector<16x16xf32>
    %c0_1 = arith.constant 0 : index
    %c0_2 = arith.constant 0 : index
    %1 = vector.load %arg2[%c0_1, %c0_2] : memref<16x256xf32, #tpu.memory_space<vmem>>, vector<16x256xf32>
    %cst = arith.constant dense<0.000000e+00> : vector<16x256xf32>
    %2 = tpu.matmul %0, %1, %cst {dimension_numbers = #tpu.dot_dimension_numbers<[1], [0], [0], [1], [0, 0, 1, 1], [], []>} : vector<16x16xf32>, vector<16x256xf32>, vector<16x256xf32> -> vector<16x256xf32>
    %c0_3 = arith.constant 0 : index
    %c0_4 = arith.constant 0 : index
    %3 = vector.load %arg3[%c0_3, %c0_4] : memref<1x256xf32, #tpu.memory_space<vmem>>, vector<1x256xf32>
    %4 = vector.broadcast %3 : vector<1x256xf32> to vector<16x256xf32>
    %5 = arith.addf %2, %4 : vector<16x256xf32>
    %cst_5 = arith.constant 5.000000e-01 : f32
    %6 = vector.broadcast %cst_5 : f32 to vector<16x256xf32>
    %7 = arith.mulf %6, %5 : vector<16x256xf32>
    %cst_6 = arith.constant 0.707106769 : f32
    %8 = vector.broadcast %cst_6 : f32 to vector<16x256xf32>
    %9 = arith.mulf %5, %8 : vector<16x256xf32>
    %10 = math.erf %9 : vector<16x256xf32>
    %cst_7 = arith.constant 1.000000e+00 : f32
    %11 = vector.broadcast %cst_7 : f32 to vector<16x256xf32>
    %12 = arith.addf %11, %10 : vector<16x256xf32>
    %13 = arith.mulf %7, %12 : vector<16x256xf32>
    %c0_8 = arith.constant 0 : index
    %c0_9 = arith.constant 0 : index
    %14 = vector.load %arg4[%c0_8, %c0_9] : memref<256x16xf32, #tpu.memory_space<vmem>>, vector<256x16xf32>
    %cst_10 = arith.constant dense<0.000000e+00> : vector<16x16xf32>
    %15 = tpu.matmul %13, %14, %cst_10 {dimension_numbers = #tpu.dot_dimension_numbers<[1], [0], [0], [1], [0, 0, 1, 1], [], []>} : vector<16x256xf32>, vector<256x16xf32>, vector<16x16xf32> -> vector<16x16xf32>
    %c0_11 = arith.constant 0 : index
    %c0_12 = arith.constant 0 : index
    %16 = vector.load %arg5[%c0_11, %c0_12] : memref<1x16xf32, #tpu.memory_space<vmem>>, vector<1x16xf32>
    %17 = vector.broadcast %16 : vector<1x16xf32> to vector<16x16xf32>
    %18 = arith.addf %15, %17 : vector<16x16xf32>
    %cst_13 = arith.constant 5.000000e-01 : f32
    %19 = vector.broadcast %cst_13 : f32 to vector<16x16xf32>
    %20 = arith.mulf %19, %18 : vector<16x16xf32>
    %cst_14 = arith.constant 0.707106769 : f32
    %21 = vector.broadcast %cst_14 : f32 to vector<16x16xf32>
    %22 = arith.mulf %18, %21 : vector<16x16xf32>
    %23 = math.erf %22 : vector<16x16xf32>
    %cst_15 = arith.constant 1.000000e+00 : f32
    %24 = vector.broadcast %cst_15 : f32 to vector<16x16xf32>
    %25 = arith.addf %24, %23 : vector<16x16xf32>
    %26 = arith.mulf %20, %25 : vector<16x16xf32>
    %c0_16 = arith.constant 0 : index
    %c0_17 = arith.constant 0 : index
    %27 = vector.load %arg6[%c0_16, %c0_17] : memref<16x16xf32, #tpu.memory_space<vmem>>, vector<16x16xf32>
    tpu.vector_store %arg6[%c0_16, %c0_17], %26 {strides = array<i32>} : memref<16x16xf32, #tpu.memory_space<vmem>>, vector<16x16xf32>,
    return
  }
  func.func @transform_0(%arg0: i32) -> (i32, i32) {
    %c0_i32 = arith.constant 0 : i32
    %c0_i32_0 = arith.constant 0 : i32
    return %arg0, %c0_i32 : i32, i32
  }
  func.func @transform_1(%arg0: i32) -> (i32, i32) {
    %c0_i32 = arith.constant 0 : i32
    %c0_i32_0 = arith.constant 0 : i32
    %c0_i32_1 = arith.constant 0 : i32
    return %c0_i32, %c0_i32_0 : i32, i32
  }
  func.func @transform_2(%arg0: i32) -> (i32, i32) {
    %c0_i32 = arith.constant 0 : i32
    %c0_i32_0 = arith.constant 0 : i32
    %c0_i32_1 = arith.constant 0 : i32
    return %c0_i32, %c0_i32_0 : i32, i32
  }
  func.func @transform_3(%arg0: i32) -> (i32, i32) {
    %c0_i32 = arith.constant 0 : i32
    %c0_i32_0 = arith.constant 0 : i32
    %c0_i32_1 = arith.constant 0 : i32
    return %c0_i32, %c0_i32_0 : i32, i32
  }
  func.func @transform_4(%arg0: i32) -> (i32, i32) {
    %c0_i32 = arith.constant 0 : i32
    %c0_i32_0 = arith.constant 0 : i32
    %c0_i32_1 = arith.constant 0 : i32
    return %c0_i32, %c0_i32_0 : i32, i32
  }
  func.func @transform_5(%arg0: i32) -> (i32, i32) {
    %c0_i32 = arith.constant 0 : i32
    %c0_i32_0 = arith.constant 0 : i32
    return %arg0, %c0_i32 : i32, i32
  }
}

</mosaic_0001>

<llo_original>
// kernel: tpu_custom_call.1
$region0: #{tpu_custom_call.1}
  #allocation0 [shape = 'u32[]', space=smem, size = 0x4, offset = 0x4, fixed_abs, tag = 'smem constant byte address 0x4 - core index']
  #allocation1 [shape = 'u32[144,128]{1,0:T(1,128)}', space=vmem, size = 0x12000, scoped, tag = 'internal scratch']
  %s0 = inlined_call_operand.hbm [shape: f32[8,128], index: 0, kind: input, shape index: {}]
  %s1 = inlined_call_operand.hbm [shape: f32[8,128], index: 1, kind: output, shape index: {}]
  %s2 = sld [smem:[#allocation0]]
  $region41: #{tpu_custom_call.1} parent=0
    _
  %s4 = ssub.s32 1, %s2
  %s5 = scalar_select 0, %s4, %s2
  $region1: #{tpu_custom_call.1} parent=0
    #allocation2 [shape = 'u8[4096]{0}', space=vmem, size = 0x1000, scoped, tag = 'input window, operand 0, single buffered']
    #allocation3 [shape = 's32[2]{0}', space=sflag, size = 0x8, scoped, tag = 'scoped memory for tpu_custom_call.1']
    #allocation4 [shape = 's32[2]{0}', space=sflag, size = 0x8, scoped, tag = 'scoped memory for tpu_custom_call.1']
    #allocation5 [shape = 'u8[4096]{0}', space=vmem, size = 0x1000, scoped, tag = 'output window, operand 0, single buffered']
    %6 = vsyncpa [#allocation3], 0
    %7 = vsyncpa [#allocation4], 0
    loop: start=0, step=1, limit=4
    $region2: #{tpu_custom_call.1} parent=1 // loop_pre_header
      _
    $region3: #{tpu_custom_call.1} parent=1 // loop_header
      %s9 = sphi 0, %s13
      %p10 = scmp.ge.s32.totalorder %s9, 4
      %s17 = sphi 0, %s17
      %s19 = sphi 0, %s17
      %s20 = sphi 0, %s19
      %s34 = sphi 0, %s20
      %s38 = sphi 0, %s38
      %s40 = sphi 0, %s38
      %s41 = sphi 0, %s40
      %s55 = sphi 0, %s41
    $region4: #{tpu_custom_call.1} parent=1 // loop_header_branch
      %12 = sbr.rel (%p10) target = $region8
    $region5: #{tpu_custom_call.1} parent=1 // loop_body
      %s14 = ssub.s32 %s9, 1
      %s15 = ssub.s32 %s9, 2
      %s16 = sadd.s32 %s9, 1
      %s18 = sadd.s32 %s17, 1
      %p21 = scmp.eq.s32.totalorder %s9, 1
      %p22 = scmp.ne.s32.totalorder %s17, %s19
      %p23 = scmp.eq.s32.totalorder %s9, 0
      %p24 = por %p22, %p23
      %p25 = scmp.ne.s32.totalorder %s17, %s19
      %p26 = scmp.eq.s32.totalorder %s14, 1
      %p27 = por %p25, %p26
      %p28 = scmp.ne.s32.totalorder %s19, %s20
      %p29 = scmp.eq.s32.totalorder %s14, 0
      %p30 = por %p28, %p29
      %p31 = scmp.ne.s32.totalorder %s19, %s20
      %p32 = scmp.eq.s32.totalorder %s15, 1
      %p33 = por %p31, %p32
      %p35 = scmp.ne.s32.totalorder %s20, %s34
      %p36 = scmp.eq.s32.totalorder %s15, 0
      %p37 = por %p35, %p36
      %s39 = sadd.s32 %s38, 1
      %p42 = scmp.eq.s32.totalorder %s9, 1
      %p43 = scmp.ne.s32.totalorder %s38, %s40
      %p44 = scmp.eq.s32.totalorder %s9, 0
      %p45 = por %p43, %p44
      %p46 = scmp.ne.s32.totalorder %s38, %s40
      %p47 = scmp.eq.s32.totalorder %s14, 1
      %p48 = por %p46, %p47
      %p49 = scmp.ne.s32.totalorder %s40, %s41
      %p50 = scmp.eq.s32.totalorder %s14, 0
      %p51 = por %p49, %p50
      %p52 = scmp.ne.s32.totalorder %s40, %s41
      %p53 = scmp.eq.s32.totalorder %s15, 1
      %p54 = por %p52, %p53
      %p56 = scmp.ne.s32.totalorder %s41, %s55
      %p57 = scmp.eq.s32.totalorder %s15, 0
      %p58 = por %p56, %p57
      %p59 = scmp.le.s32.totalorder 1, %s9
      %p60 = scmp.lt.s32.totalorder %s9, 3
      %p61 = pnand %p59, %p60
      %p62 = pneg %p61
      // Predicated region
      $region9: #{tpu_custom_call.1} parent=5 // pred_check
        _
      $region10: #{tpu_custom_call.1} parent=5 // pred_check_branch
        %64 = sbr.rel (%p61) target = $region12
      $region11: #{tpu_custom_call.1} parent=5 // pred_region
        %s65 = ssub.s32 %s9, 1
        // Predicated region
        $region13: #{tpu_custom_call.1} parent=11 // pred_check
          %p66 = pneg %p30
        $region14: #{tpu_custom_call.1} parent=11 // pred_check_branch
          %68 = sbr.rel (%p66) target = $region16
        $region15: #{tpu_custom_call.1} parent=11 // pred_region
          %s70 = ssub.s32 128, 128
          %71 = vsyncadd [#allocation3], %s70
          %s73 = sshll.u32 [#allocation2], 4
          %s74 = int_to_ptr.vmem [resolvable:$true] %s73
          %76 = dma.hbm_to_vmem [thread:$0]  %s0, 128, %s74, [#allocation3]
        $region16: #{tpu_custom_call.1} parent=11 // pred_fallthru
          _
      $region12: #{tpu_custom_call.1} parent=5 // pred_fallthru
        _
      %p77 = scmp.lt.s32.totalorder %s9, 2
      // Predicated region
      $region17: #{tpu_custom_call.1} parent=5 // pred_check
        %p78 = pneg %p77
      $region18: #{tpu_custom_call.1} parent=5 // pred_check_branch
        %80 = sbr.rel (%p78) target = $region20
      $region19: #{tpu_custom_call.1} parent=5 // pred_region
        _
      $region20: #{tpu_custom_call.1} parent=5 // pred_fallthru
        _
      %p81 = scmp.le.s32.totalorder 1, %s9
      %p82 = scmp.lt.s32.totalorder %s9, 3
      %p83 = pnand %p81, %p82
      %p84 = pneg %p83
      // Predicated region
      $region21: #{tpu_custom_call.1} parent=5 // pred_check
        _
      $region22: #{tpu_custom_call.1} parent=5 // pred_check_branch
        %86 = sbr.rel (%p83) target = $region24
      $region23: #{tpu_custom_call.1} parent=5 // pred_region
        %s87 = ssub.s32 %s9, 1
        // Predicated region
        $region25: #{tpu_custom_call.1} parent=23 // pred_check
          %p88 = pneg %p30
        $region26: #{tpu_custom_call.1} parent=23 // pred_check_branch
          %90 = sbr.rel (%p88) target = $region28
        $region27: #{tpu_custom_call.1} parent=23 // pred_region
          %91 = dma.done [#allocation3], 128
        $region28: #{tpu_custom_call.1} parent=23 // pred_fallthru
          _
        %p92 = pneg %p30
        %p93 = pneg %p27
        %p94 = pneg %p51
        %p95 = pneg %p48
        %v96 = vld [vmem:[#allocation2] sm:$0xff]
        %v97 = vadd.f32 %v96, 1.0
        %98 = vst [vmem:[#allocation5] sm:$0xff] %v97
        // Predicated region
        $region29: #{tpu_custom_call.1} parent=23 // pred_check
          %p99 = pneg %p48
        $region30: #{tpu_custom_call.1} parent=23 // pred_check_branch
          %101 = sbr.rel (%p99) target = $region32
        $region31: #{tpu_custom_call.1} parent=23 // pred_region
          %s103 = ssub.s32 128, 128
          %104 = vsyncadd [#allocation4], %s103
          %s106 = sshll.u32 [#allocation5], 4
          %s107 = int_to_ptr.vmem [resolvable:$true] %s106
          %109 = dma.vmem_to_hbm [thread:$0]  %s107, 128, %s1, [#allocation4]
        $region32: #{tpu_custom_call.1} parent=23 // pred_fallthru
          _
        // Predicated region
        $region33: #{tpu_custom_call.1} parent=23 // pred_check
          %p110 = pneg %p48
        $region34: #{tpu_custom_call.1} parent=23 // pred_check_branch
          %112 = sbr.rel (%p110) target = $region36
        $region35: #{tpu_custom_call.1} parent=23 // pred_region
          %113 = dma.done [#allocation4], 128
        $region36: #{tpu_custom_call.1} parent=23 // pred_fallthru
          _
      $region24: #{tpu_custom_call.1} parent=5 // pred_fallthru
        _
      %p114 = scmp.le.s32.totalorder 2, %s9
      // Predicated region
      $region37: #{tpu_custom_call.1} parent=5 // pred_check
        %p115 = pneg %p114
      $region38: #{tpu_custom_call.1} parent=5 // pred_check_branch
        %117 = sbr.rel (%p115) target = $region40
      $region39: #{tpu_custom_call.1} parent=5 // pred_region
        %s118 = ssub.s32 %s9, 2
      $region40: #{tpu_custom_call.1} parent=5 // pred_fallthru
        _
    $region6: #{tpu_custom_call.1} parent=1 // loop_footer
      %s13 = sadd.s32 1, %s9
    $region7: #{tpu_custom_call.1} parent=1 // loop_footer_branch
      %8 = sbr.rel target = $region3
    $region8: #{tpu_custom_call.1} parent=1 // loop_exit
      _
    %119 = vsyncpa [#allocation3], 1
    %s120 = scalar_lea.sflag [#allocation3], 1
    %121 = vsyncpa %s120, 1
    %122 = vsyncpa [#allocation4], 1
    %s123 = scalar_lea.sflag [#allocation4], 1
    %124 = vsyncpa %s123, 1

// kernel: _mlp_pallas_jit.1
$region0: #{_mlp_pallas_jit.1}
  #allocation0 [shape = 'u32[]', space=smem, size = 0x4, offset = 0x4, fixed_abs, tag = 'smem constant byte address 0x4 - core index']
  #allocation1 [shape = 'u32[144,128]{1,0:T(1,128)}', space=vmem, size = 0x12000, scoped, tag = 'internal scratch']
  %s0 = inlined_call_operand.vmem [shape: f32[16,16], index: 0, kind: input, shape index: {}]
  %s1 = inlined_call_operand.vmem [shape: f32[16,256], index: 1, kind: input, shape index: {}]
  %s2 = inlined_call_operand.vmem [shape: f32[1,256], index: 2, kind: input, shape index: {}]
  %s3 = inlined_call_operand.vmem [shape: f32[256,16], index: 3, kind: input, shape index: {}]
  %s4 = inlined_call_operand.vmem [shape: f32[1,16], index: 4, kind: input, shape index: {}]
  %s5 = inlined_call_operand.hbm [shape: f32[16,16], index: 5, kind: output, shape index: {}]
  %s6 = sld [smem:[#allocation0]]
  $region30: #{_mlp_pallas_jit.1} parent=0
    _
  %s8 = ssub.s32 1, %s6
  %s9 = scalar_select 0, %s8, %s6
  $region1: #{_mlp_pallas_jit.1} parent=0
    #allocation2 [shape = 'u8[8192]{0}', space=vmem, size = 0x2000, scoped, tag = 'output window, operand 0, single buffered']
    #allocation3 [shape = 's32[1]{0}', space=sflag, size = 0x4, scoped, tag = 'scoped memory for _mlp_pallas_jit.1']
    %10 = vsyncpa [#allocation3], 0
    // Predicated region
    $region2: #{_mlp_pallas_jit.1} parent=1 // pred_check
      _
    $region3: #{_mlp_pallas_jit.1} parent=1 // pred_check_branch
      %12 = sbr.rel (0) target = $region5
    $region4: #{_mlp_pallas_jit.1} parent=1 // pred_region
      _
    $region5: #{_mlp_pallas_jit.1} parent=1 // pred_fallthru
      _
    // Predicated region
    $region6: #{_mlp_pallas_jit.1} parent=1 // pred_check
      _
    $region7: #{_mlp_pallas_jit.1} parent=1 // pred_check_branch
      %14 = sbr.rel (0) target = $region9
    $region8: #{_mlp_pallas_jit.1} parent=1 // pred_region
      _
    $region9: #{_mlp_pallas_jit.1} parent=1 // pred_fallthru
      _
    // Predicated region
    $region10: #{_mlp_pallas_jit.1} parent=1 // pred_check
      _
    $region11: #{_mlp_pallas_jit.1} parent=1 // pred_check_branch
      %16 = sbr.rel (0) target = $region13
    $region12: #{_mlp_pallas_jit.1} parent=1 // pred_region
      _
    $region13: #{_mlp_pallas_jit.1} parent=1 // pred_fallthru
      _
    // Predicated region
    $region14: #{_mlp_pallas_jit.1} parent=1 // pred_check
      _
    $region15: #{_mlp_pallas_jit.1} parent=1 // pred_check_branch
      %18 = sbr.rel (0) target = $region17
    $region16: #{_mlp_pallas_jit.1} parent=1 // pred_region
      _
    $region17: #{_mlp_pallas_jit.1} parent=1 // pred_fallthru
      _
    // Predicated region
    $region18: #{_mlp_pallas_jit.1} parent=1 // pred_check
      _
    $region19: #{_mlp_pallas_jit.1} parent=1 // pred_check_branch
      %20 = sbr.rel (0) target = $region21
    $region20: #{_mlp_pallas_jit.1} parent=1 // pred_region
      _
    $region21: #{_mlp_pallas_jit.1} parent=1 // pred_fallthru
      _
    %v21 = vld [vmem:[%s0] sm:$0xff]
    %v22 = vld [vmem:[%s0 + $0x8] sm:$0xff]
    %v23 = vld [vmem:[%s1] sm:$0xff]
    %v24 = vld [vmem:[%s1 + $0x8] sm:$0xff]
    %v25 = vld [vmem:[%s1 + $0x10] sm:$0xff]
    %v26 = vld [vmem:[%s1 + $0x18] sm:$0xff]
    %v27 = vld [vmem:[%s2] sm:$0x3]
    %v29 = vlaneseq
    %v30 = vshrl.u32 %v29, 7
    %v31 = vsub.s32 0, %v30
    %v32 = vrot.slane %v27, %v31
    %v33 = vlaneseq
    %v34 = vshrl.u32 %v33, 7
    %v35 = vsub.s32 1, %v34
    %v36 = vrot.slane %v27, %v35
    %vm39 = vcmask 130048
    %v41 = vsel %vm39, %v21, 0
    %v44 = vsel %vm39, %v22, 0
    %46 = vmatprep.subr.mxu0 0.0
    %47 = vmatpush1.msra.mxu0 0.0
    %48 = vmatprep.subr.mxu0 0.0
    %49 = vmatpush1.msra.mxu0 0.0
    %50 = vmatprep.subr.mxu0 0.0
    %51 = vmatpush1.msra.mxu0 0.0
    %52 = vmatprep.subr.mxu0 0.0
    %53 = vmatpush1.msra.mxu0 0.0
    %54 = vmatprep.subr.mxu0 0.0
    %55 = vmatpush1.msra.mxu0 0.0
    %56 = vmatprep.subr.mxu0 0.0
    %57 = vmatpush1.msra.mxu0 0.0
    %58 = vmatprep.subr.mxu0 0.0
    %59 = vmatpush1.msra.mxu0 0.0
    %60 = vmatprep.subr.mxu0 0.0
    %61 = vmatpush1.msra.mxu0 0.0
    %62 = vmatprep.subr.mxu0 0.0
    %63 = vmatpush1.msra.mxu0 0.0
    %64 = vmatprep.subr.mxu0 0.0
    %65 = vmatpush1.msra.mxu0 0.0
    %66 = vmatprep.subr.mxu0 0.0
    %67 = vmatpush1.msra.mxu0 0.0
    %68 = vmatprep.subr.mxu0 0.0
    %69 = vmatpush1.msra.mxu0 0.0
    %70 = vmatprep.subr.mxu0 0.0
    %71 = vmatpush1.msra.mxu0 0.0
    %72 = vmatprep.subr.mxu0 0.0
    %73 = vmatpush1.msra.mxu0 0.0
    %74 = vmatprep.subr.mxu0 %v26
    %75 = vmatpush1.msra.mxu0 %v25
    %76 = vmatprep.subr.mxu0 %v24
    %77 = vmatpush1.msra.mxu0 %v23
    %78 = vmatprep.subr.mxu0 0.0
    %79 = vmatpush2.msra.mxu0 0.0
    %80 = vmatprep.subr.mxu0 0.0
    %81 = vmatpush2.msra.mxu0 0.0
    %82 = vmatprep.subr.mxu0 0.0
    %83 = vmatpush2.msra.mxu0 0.0
    %84 = vmatprep.subr.mxu0 0.0
    %85 = vmatpush2.msra.mxu0 0.0
    %86 = vmatprep.subr.mxu0 0.0
    %87 = vmatpush2.msra.mxu0 0.0
    %88 = vmatprep.subr.mxu0 0.0
    %89 = vmatpush2.msra.mxu0 0.0
    %90 = vmatprep.subr.mxu0 0.0
    %91 = vmatpush2.msra.mxu0 0.0
    %92 = vmatprep.subr.mxu0 0.0
    %93 = vmatpush2.msra.mxu0 0.0
    %94 = vmatprep.subr.mxu0 0.0
    %95 = vmatpush2.msra.mxu0 0.0
    %96 = vmatprep.subr.mxu0 0.0
    %97 = vmatpush2.msra.mxu0 0.0
    %98 = vmatprep.subr.mxu0 0.0
    %99 = vmatpush2.msra.mxu0 0.0
    %100 = vmatprep.subr.mxu0 0.0
    %101 = vmatpush2.msra.mxu0 0.0
    %102 = vmatprep.subr.mxu0 0.0
    %103 = vmatpush2.msra.mxu0 0.0
    %104 = vmatprep.subr.mxu0 0.0
    %105 = vmatpush2.msra.mxu0 0.0
    %106 = vmatprep.subr.mxu0 0.0
    %107 = vmatpush2.msra.mxu0 0.0
    %108 = vmatprep.subr.mxu0 0.0
    %109 = vmatpush2.msra.mxu0 0.0
    %110 = vmatprep.mubr.f32.mxu0 0.0
    %111 = vmatmul.mubr.f32.gmra.mxu0 %v41
    %v112 = vpop.f32.mrf.mxu0
    %v113 = vadd.f32 %v32, %v112
    %v114 = vpop.f32.mrf.mxu0
    %v115 = vadd.f32 %v36, %v114
    %116 = vmatprep.mubr.f32.mxu0 0.0
    %117 = vmatmul.mubr.f32.gmra.mxu0 %v44
    %v118 = vpop.f32.mrf.mxu0
    %v119 = vadd.f32 %v32, %v118
    %v120 = vpop.f32.mrf.mxu0
    %v121 = vadd.f32 %v36, %v120
    %122 = vdwg.mxu0
    %v123 = vmul.f32 %v113, 0.5
    %v124 = vmul.f32 %v115, 0.5
    %v125 = vmul.f32 %v119, 0.5
    %v126 = vmul.f32 %v121, 0.5
    %v127 = vmul.f32 %v113, 0.70710677
    %v128 = vmul.f32 %v115, 0.70710677
    %v129 = vmul.f32 %v119, 0.70710677
    %v130 = vmul.f32 %v121, 0.70710677
    %v131 = verf.f32.pop %v127
    %v132 = verf.f32.pop %v128
    %v133 = verf.f32.pop %v129
    %v134 = verf.f32.pop %v130
    %v135 = vadd.f32 %v131, 1.0
    %v136 = vadd.f32 %v132, 1.0
    %v137 = vadd.f32 %v133, 1.0
    %v138 = vadd.f32 %v134, 1.0
    %v139 = vmul.f32 %v123, %v135
    %v140 = vmul.f32 %v124, %v136
    %v141 = vmul.f32 %v125, %v137
    %v142 = vmul.f32 %v126, %v138
    %v143 = vld [vmem:[%s3] sm:$0xff]
    %v144 = vld [vmem:[%s3 + $0x8] sm:$0xff]
    %v145 = vld [vmem:[%s3 + $0x10] sm:$0xff]
    %v146 = vld [vmem:[%s3 + $0x18] sm:$0xff]
    %v147 = vld [vmem:[%s3 + $0x20] sm:$0xff]
    %v148 = vld [vmem:[%s3 + $0x28] sm:$0xff]
    %v149 = vld [vmem:[%s3 + $0x30] sm:$0xff]
    %v150 = vld [vmem:[%s3 + $0x38] sm:$0xff]
    %v151 = vld [vmem:[%s3 + $0x40] sm:$0xff]
    %v152 = vld [vmem:[%s3 + $0x48] sm:$0xff]
    %v153 = vld [vmem:[%s3 + $0x50] sm:$0xff]
    %v154 = vld [vmem:[%s3 + $0x58] sm:$0xff]
    %v155 = vld [vmem:[%s3 + $0x60] sm:$0xff]
    %v156 = vld [vmem:[%s3 + $0x68] sm:$0xff]
    %v157 = vld [vmem:[%s3 + $0x70] sm:$0xff]
    %v158 = vld [vmem:[%s3 + $0x78] sm:$0xff]
    %v159 = vld [vmem:[%s3 + $0x80] sm:$0xff]
    %v160 = vld [vmem:[%s3 + $0x88] sm:$0xff]
    %v161 = vld [vmem:[%s3 + $0x90] sm:$0xff]
    %v162 = vld [vmem:[%s3 + $0x98] sm:$0xff]
    %v163 = vld [vmem:[%s3 + $0xa0] sm:$0xff]
    %v164 = vld [vmem:[%s3 + $0xa8] sm:$0xff]
    %v165 = vld [vmem:[%s3 + $0xb0] sm:$0xff]
    %v166 = vld [vmem:[%s3 + $0xb8] sm:$0xff]
    %v167 = vld [vmem:[%s3 + $0xc0] sm:$0xff]
    %v168 = vld [vmem:[%s3 + $0xc8] sm:$0xff]
    %v169 = vld [vmem:[%s3 + $0xd0] sm:$0xff]
    %v170 = vld [vmem:[%s3 + $0xd8] sm:$0xff]
    %v171 = vld [vmem:[%s3 + $0xe0] sm:$0xff]
    %v172 = vld [vmem:[%s3 + $0xe8] sm:$0xff]
    %v173 = vld [vmem:[%s3 + $0xf0] sm:$0xff]
    %v174 = vld [vmem:[%s3 + $0xf8] sm:$0xff]
    %v175 = vld [vmem:[%s4] sm:$0x1]
    %v177 = vlaneseq
    %v178 = vshrl.u32 %v177, 7
    %v179 = vsub.s32 0, %v178
    %v180 = vrot.slane %v175, %v179
    %182 = vmatprep.subr.mxu0 0.0
    %183 = vmatpush1.msra.mxu0 %v158
    %184 = vmatprep.subr.mxu0 0.0
    %185 = vmatpush1.msra.mxu0 %v157
    %186 = vmatprep.subr.mxu0 0.0
    %187 = vmatpush1.msra.mxu0 %v156
    %188 = vmatprep.subr.mxu0 0.0
    %189 = vmatpush1.msra.mxu0 %v155
    %190 = vmatprep.subr.mxu0 0.0
    %191 = vmatpush1.msra.mxu0 %v154
    %192 = vmatprep.subr.mxu0 0.0
    %193 = vmatpush1.msra.mxu0 %v153
    %194 = vmatprep.subr.mxu0 0.0
    %195 = vmatpush1.msra.mxu0 %v152
    %196 = vmatprep.subr.mxu0 0.0
    %197 = vmatpush1.msra.mxu0 %v151
    %198 = vmatprep.subr.mxu0 0.0
    %199 = vmatpush1.msra.mxu0 %v150
    %200 = vmatprep.subr.mxu0 0.0
    %201 = vmatpush1.msra.mxu0 %v149
    %202 = vmatprep.subr.mxu0 0.0
    %203 = vmatpush1.msra.mxu0 %v148
    %204 = vmatprep.subr.mxu0 0.0
    %205 = vmatpush1.msra.mxu0 %v147
    %206 = vmatprep.subr.mxu0 0.0
    %207 = vmatpush1.msra.mxu0 %v146
    %208 = vmatprep.subr.mxu0 0.0
    %209 = vmatpush1.msra.mxu0 %v145
    %210 = vmatprep.subr.mxu0 0.0
    %211 = vmatpush1.msra.mxu0 %v144
    %212 = vmatprep.subr.mxu0 0.0
    %213 = vmatpush1.msra.mxu0 %v143
    %214 = vmatprep.subr.mxu0 0.0
    %215 = vmatpush2.msra.mxu0 %v174
    %216 = vmatprep.subr.mxu0 0.0
    %217 = vmatpush2.msra.mxu0 %v173
    %218 = vmatprep.subr.mxu0 0.0
    %219 = vmatpush2.msra.mxu0 %v172
    %220 = vmatprep.subr.mxu0 0.0
    %221 = vmatpush2.msra.mxu0 %v171
    %222 = vmatprep.subr.mxu0 0.0
    %223 = vmatpush2.msra.mxu0 %v170
    %224 = vmatprep.subr.mxu0 0.0
    %225 = vmatpush2.msra.mxu0 %v169
    %226 = vmatprep.subr.mxu0 0.0
    %227 = vmatpush2.msra.mxu0 %v168
    %228 = vmatprep.subr.mxu0 0.0
    %229 = vmatpush2.msra.mxu0 %v167
    %230 = vmatprep.subr.mxu0 0.0
    %231 = vmatpush2.msra.mxu0 %v166
    %232 = vmatprep.subr.mxu0 0.0
    %233 = vmatpush2.msra.mxu0 %v165
    %234 = vmatprep.subr.mxu0 0.0
    %235 = vmatpush2.msra.mxu0 %v164
    %236 = vmatprep.subr.mxu0 0.0
    %237 = vmatpush2.msra.mxu0 %v163
    %238 = vmatprep.subr.mxu0 0.0
    %239 = vmatpush2.msra.mxu0 %v162
    %240 = vmatprep.subr.mxu0 0.0
    %241 = vmatpush2.msra.mxu0 %v161
    %242 = vmatprep.subr.mxu0 0.0
    %243 = vmatpush2.msra.mxu0 %v160
    %244 = vmatprep.subr.mxu0 0.0
    %245 = vmatpush2.msra.mxu0 %v159
    %246 = vmatprep.mubr.f32.mxu0 %v140
    %247 = vmatmul.mubr.f32.gmra.mxu0 %v139
    %v248 = vpop.f32.mrf.mxu0
    %v249 = vadd.f32 %v180, %v248
    %v250 = vpop.f32.mrf.mxu0
    %251 = vmatprep.mubr.f32.mxu0 %v142
    %252 = vmatmul.mubr.f32.gmra.mxu0 %v141
    %v253 = vpop.f32.mrf.mxu0
    %v254 = vadd.f32 %v180, %v253
    %v255 = vpop.f32.mrf.mxu0
    %256 = vdwg.mxu0
    %v257 = vmul.f32 %v249, 0.5
    %v258 = vmul.f32 %v254, 0.5
    %v259 = vmul.f32 %v249, 0.70710677
    %v260 = vmul.f32 %v254, 0.70710677
    %v261 = verf.f32.pop %v259
    %v262 = verf.f32.pop %v260
    %v263 = vadd.f32 %v261, 1.0
    %v264 = vadd.f32 %v262, 1.0
    %v265 = vmul.f32 %v257, %v263
    %v266 = vmul.f32 %v258, %v264
    %267 = vst.msk [vmem:[#allocation2] sm:$0xff] %vm39, %v265
    %268 = vst.msk [vmem:[#allocation2 + $0x8] sm:$0xff] %vm39, %v266
    // Predicated region
    $region22: #{_mlp_pallas_jit.1} parent=1 // pred_check
      _
    $region23: #{_mlp_pallas_jit.1} parent=1 // pred_check_branch
      %270 = sbr.rel (0) target = $region25
    $region24: #{_mlp_pallas_jit.1} parent=1 // pred_region
      %s272 = ssub.s32 256, 256
      %273 = vsyncadd [#allocation3], %s272
      %s274 = sshll.u32 [#allocation2], 4
      %s275 = int_to_ptr.vmem [resolvable:$true] %s274
      %280 = dma.vmem_to_hbm [thread:$0]  %s275, 256, %s5, [#allocation3], 128, 128, 8
    $region25: #{_mlp_pallas_jit.1} parent=1 // pred_fallthru
      _
    // Predicated region
    $region26: #{_mlp_pallas_jit.1} parent=1 // pred_check
      _
    $region27: #{_mlp_pallas_jit.1} parent=1 // pred_check_branch
      %282 = sbr.rel (0) target = $region29
    $region28: #{_mlp_pallas_jit.1} parent=1 // pred_region
      %283 = dma.done [#allocation3], 256
    $region29: #{_mlp_pallas_jit.1} parent=1 // pred_fallthru
      _
    %284 = vsyncpa [#allocation3], 1

</llo_original>
